<compile_context>
chip_gen: v7x
topology: tpu7x:2x2x1
jax: 0.10.0
libtpu: 0.0.40
codegen_flags: <defaults>
</compile_context>

<pallas_src>
import jax
import jax.numpy as jnp
from jax.experimental import pallas as pl
from jax.experimental.pallas import tpu as pltpu

CIFAR_MEAN = [0.4914, 0.4822, 0.4465]
CIFAR_STD = [0.247, 0.2435, 0.2616]


def get_cifar_params(resol, dtype=jnp.float32):
    """Deterministic parameter construction (mirrors the torch version)."""
    mean = jnp.stack(
        [jnp.full((resol, resol), CIFAR_MEAN[i], dtype=dtype) for i in range(3)]
    )[None]  # (1, 3, R, R)
    std = jnp.stack(
        [jnp.full((resol, resol), CIFAR_STD[i], dtype=dtype) for i in range(3)]
    )[None]  # (1, 3, R, R)
    return mean, std


def _normalize_kernel(x_ref, std_ref, mean_ref, o_ref):
    # Elementwise fused multiply-add on the VPU: out = x * std + mean.
    # x_ref block is (rb, L); std_ref/mean_ref are (1, L) and broadcast over rows.
    o_ref[...] = x_ref[...] * std_ref[...] + mean_ref[...]


def cifar_in_normalize(x, mean, std):
    """x: (B, C, H, W).  Returns x * std + mean (broadcast over batch)."""
    B, C, H, W = x.shape
    assert mean.shape == (1, C, H, W) and std.shape == (1, C, H, W)

    L = C * H * W  # lane-dense flattened image length (multiple of 128 for CIFAR)
    x2 = x.reshape(B, L)
    std_row = std.reshape(1, L)
    mean_row = mean.reshape(1, L)

    # Rows (images) per grid step: largest block <= ~2 MiB.  If the batch is
    # split across grid steps, keep the row count a multiple of 8 (sublane rule);
    # otherwise use the full batch extent (always legal).
    bytes_per_row = L * x2.dtype.itemsize
    target_block_bytes = 2 * 1024 * 1024
    rb = max(1, target_block_bytes // bytes_per_row)
    if rb >= B:
        rb = B
    else:
        rb = max(8, (rb // 8) * 8)
    num_blocks = pl.cdiv(B, rb)

    out2 = pl.pallas_call(
        _normalize_kernel,
        out_shape=jax.ShapeDtypeStruct((B, L), x2.dtype),
        grid_spec=pl.GridSpec(
            grid=(num_blocks,),
            in_specs=[
                pl.BlockSpec((rb, L), lambda i: (i, 0)),
                pl.BlockSpec((1, L), lambda i: (0, 0)),   # std, resident
                pl.BlockSpec((1, L), lambda i: (0, 0)),   # mean, resident
            ],
            out_specs=pl.BlockSpec((rb, L), lambda i: (i, 0)),
        ),
        compiler_params=pltpu.CompilerParams(
            dimension_semantics=("parallel",),
        ),
    )(x2, std_row, mean_row)

    return out2.reshape(B, C, H, W)


if __name__ == "__main__":
    resol = 16
    batch = 2

    key = jax.random.PRNGKey(0)
    x = jax.random.normal(key, (batch, 3, resol, resol), dtype=jnp.float32)

    mean, std = get_cifar_params(resol)

    out = cifar_in_normalize(x, mean, std)
    out = jax.block_until_ready(out)

    # Reference check against plain JAX (same semantics as the torch module).
    ref = x * std + mean
    assert out.shape == x.shape and out.dtype == x.dtype
    assert jnp.allclose(out, ref, atol=1e-6, rtol=1e-6)

    print("KERNEL_OK")
</pallas_src>

<mosaic_0001>
module attributes {stable_mosaic.version = 11 : i64} {
  func.func @_normalize_kernel(%arg0: i32, %arg1: memref<2x768xf32, #tpu.memory_space<vmem>>, %arg2: memref<1x768xf32, #tpu.memory_space<vmem>>, %arg3: memref<1x768xf32, #tpu.memory_space<vmem>>, %arg4: memref<2x768xf32, #tpu.memory_space<vmem>>) attributes {dimension_semantics = [#tpu.dimension_semantics<parallel>], iteration_bounds = array<i64: 1>, scalar_prefetch = 0 : i64, scratch_operands = 0 : i64, tpu.core_type = #tpu.core_type<tc>, window_params = [{transform_indices = @transform_0, window_bounds = array<i64: 2, 768>}, {pipeline_mode = #tpu.pipeline_mode<synchronous>, transform_indices = @transform_1, window_bounds = array<i64: 1, 768>}, {pipeline_mode = #tpu.pipeline_mode<synchronous>, transform_indices = @transform_2, window_bounds = array<i64: 1, 768>}, {transform_indices = @transform_3, window_bounds = array<i64: 2, 768>}]} {
    %c0 = arith.constant 0 : index
    %c0_0 = arith.constant 0 : index
    %0 = vector.load %arg1[%c0, %c0_0] : memref<2x768xf32, #tpu.memory_space<vmem>>, vector<2x768xf32>
    %c0_1 = arith.constant 0 : index
    %c0_2 = arith.constant 0 : index
    %1 = vector.load %arg2[%c0_1, %c0_2] : memref<1x768xf32, #tpu.memory_space<vmem>>, vector<1x768xf32>
    %2 = vector.broadcast %1 : vector<1x768xf32> to vector<2x768xf32>
    %3 = arith.mulf %0, %2 : vector<2x768xf32>
    %c0_3 = arith.constant 0 : index
    %c0_4 = arith.constant 0 : index
    %4 = vector.load %arg3[%c0_3, %c0_4] : memref<1x768xf32, #tpu.memory_space<vmem>>, vector<1x768xf32>
    %5 = vector.broadcast %4 : vector<1x768xf32> to vector<2x768xf32>
    %6 = arith.addf %3, %5 : vector<2x768xf32>
    %c0_5 = arith.constant 0 : index
    %c0_6 = arith.constant 0 : index
    %7 = vector.load %arg4[%c0_5, %c0_6] : memref<2x768xf32, #tpu.memory_space<vmem>>, vector<2x768xf32>
    tpu.vector_store %arg4[%c0_5, %c0_6], %6 {strides = array<i32>} : memref<2x768xf32, #tpu.memory_space<vmem>>, vector<2x768xf32>,
    return
  }
  func.func @transform_0(%arg0: i32) -> (i32, i32) {
    %c0_i32 = arith.constant 0 : i32
    %c0_i32_0 = arith.constant 0 : i32
    return %arg0, %c0_i32 : i32, i32
  }
  func.func @transform_1(%arg0: i32) -> (i32, i32) {
    %c0_i32 = arith.constant 0 : i32
    %c0_i32_0 = arith.constant 0 : i32
    %c0_i32_1 = arith.constant 0 : i32
    return %c0_i32, %c0_i32_0 : i32, i32
  }
  func.func @transform_2(%arg0: i32) -> (i32, i32) {
    %c0_i32 = arith.constant 0 : i32
    %c0_i32_0 = arith.constant 0 : i32
    %c0_i32_1 = arith.constant 0 : i32
    return %c0_i32, %c0_i32_0 : i32, i32
  }
  func.func @transform_3(%arg0: i32) -> (i32, i32) {
    %c0_i32 = arith.constant 0 : i32
    %c0_i32_0 = arith.constant 0 : i32
    return %arg0, %c0_i32 : i32, i32
  }
}

</mosaic_0001>

<llo_original>
// kernel: tpu_custom_call.1
$region0: #{tpu_custom_call.1}
  #allocation0 [shape = 'u32[]', space=smem, size = 0x4, offset = 0x4, fixed_abs, tag = 'smem constant byte address 0x4 - core index']
  #allocation1 [shape = 'u32[144,128]{1,0:T(1,128)}', space=vmem, size = 0x12000, scoped, tag = 'internal scratch']
  %s0 = inlined_call_operand.hbm [shape: f32[2,768], index: 0, kind: input, shape index: {}]
  %s1 = inlined_call_operand.hbm [shape: f32[1,768], index: 1, kind: input, shape index: {}]
  %s2 = inlined_call_operand.vmem [shape: f32[1,768], index: 2, kind: input, shape index: {}]
  %s3 = inlined_call_operand.hbm [shape: f32[2,768], index: 3, kind: output, shape index: {}]
  %s4 = sld [smem:[#allocation0]]
  $region30: #{tpu_custom_call.1} parent=0
    _
  %s6 = ssub.s32 1, %s4
  %s7 = scalar_select 0, %s6, %s4
  $region1: #{tpu_custom_call.1} parent=0
    #allocation2 [shape = 'u8[6144]{0}', space=vmem, size = 0x1800, scoped, tag = 'input window, operand 0, single buffered']
    #allocation3 [shape = 's32[1]{0}', space=sflag, size = 0x4, scoped, tag = 'scoped memory for tpu_custom_call.1']
    #allocation4 [shape = 's32[1]{0}', space=sflag, size = 0x4, scoped, tag = 'scoped memory for tpu_custom_call.1']
    #allocation5 [shape = 'u8[3072]{0}', space=vmem, size = 0xc00, scoped, tag = 'input window, operand 1, single buffered']
    #allocation6 [shape = 's32[1]{0}', space=sflag, size = 0x4, scoped, tag = 'scoped memory for tpu_custom_call.1']
    #allocation7 [shape = 'u8[6144]{0}', space=vmem, size = 0x1800, scoped, tag = 'output window, operand 0, single buffered']
    %8 = vsyncpa [#allocation3], 0
    %9 = vsyncpa [#allocation6], 0
    %10 = vsyncpa [#allocation4], 0
    // Predicated region
    $region2: #{tpu_custom_call.1} parent=1 // pred_check
      _
    $region3: #{tpu_custom_call.1} parent=1 // pred_check_branch
      %12 = sbr.rel (0) target = $region5
    $region4: #{tpu_custom_call.1} parent=1 // pred_region
      %s14 = ssub.s32 192, 192
      %15 = vsyncadd [#allocation3], %s14
      %s17 = sshll.u32 [#allocation2], 4
      %s18 = int_to_ptr.vmem [resolvable:$true] %s17
      %20 = dma.hbm_to_vmem [thread:$0]  %s0, 192, %s18, [#allocation3]
    $region5: #{tpu_custom_call.1} parent=1 // pred_fallthru
      _
    // Predicated region
    $region6: #{tpu_custom_call.1} parent=1 // pred_check
      _
    $region7: #{tpu_custom_call.1} parent=1 // pred_check_branch
      %22 = sbr.rel (0) target = $region9
    $region8: #{tpu_custom_call.1} parent=1 // pred_region
      %s24 = ssub.s32 96, 96
      %25 = vsyncadd [#allocation6], %s24
      %s27 = sshll.u32 [#allocation5], 4
      %s28 = int_to_ptr.vmem [resolvable:$true] %s27
      %30 = dma.hbm_to_vmem [thread:$0]  %s1, 96, %s28, [#allocation6]
    $region9: #{tpu_custom_call.1} parent=1 // pred_fallthru
      _
    // Predicated region
    $region10: #{tpu_custom_call.1} parent=1 // pred_check
      _
    $region11: #{tpu_custom_call.1} parent=1 // pred_check_branch
      %32 = sbr.rel (0) target = $region13
    $region12: #{tpu_custom_call.1} parent=1 // pred_region
      _
    $region13: #{tpu_custom_call.1} parent=1 // pred_fallthru
      _
    // Predicated region
    $region14: #{tpu_custom_call.1} parent=1 // pred_check
      _
    $region15: #{tpu_custom_call.1} parent=1 // pred_check_branch
      %34 = sbr.rel (0) target = $region17
    $region16: #{tpu_custom_call.1} parent=1 // pred_region
      %35 = dma.done [#allocation3], 192
    $region17: #{tpu_custom_call.1} parent=1 // pred_fallthru
      _
    // Predicated region
    $region18: #{tpu_custom_call.1} parent=1 // pred_check
      _
    $region19: #{tpu_custom_call.1} parent=1 // pred_check_branch
      %37 = sbr.rel (0) target = $region21
    $region20: #{tpu_custom_call.1} parent=1 // pred_region
      %38 = dma.done [#allocation6], 96
    $region21: #{tpu_custom_call.1} parent=1 // pred_fallthru
      _
    %v39 = vld [vmem:[#allocation2] sm:$0xff]
    %v40 = vld [vmem:[#allocation2 + $0x8] sm:$0xf]
    %v41 = vld [vmem:[#allocation5] sm:$0x3f]
    %v43 = vlaneseq
    %v44 = vshrl.u32 %v43, 7
    %v45 = vsub.s32 0, %v44
    %v46 = vrot.slane %v41, %v45
    %v47 = vlaneseq
    %v48 = vshrl.u32 %v47, 7
    %v49 = vsub.s32 1, %v48
    %v50 = vrot.slane %v41, %v49
    %v51 = vlaneseq
    %v52 = vshrl.u32 %v51, 7
    %v53 = vsub.s32 2, %v52
    %v54 = vrot.slane %v41, %v53
    %v55 = vlaneseq
    %v56 = vshrl.u32 %v55, 7
    %v57 = vsub.s32 3, %v56
    %v58 = vrot.slane %v41, %v57
    %v59 = vlaneseq
    %v60 = vshrl.u32 %v59, 7
    %v61 = vsub.s32 4, %v60
    %v62 = vrot.slane %v41, %v61
    %v63 = vlaneseq
    %v64 = vshrl.u32 %v63, 7
    %v65 = vsub.s32 5, %v64
    %v66 = vrot.slane %v41, %v65
    %v67 = vcombine.low %v46, %v50
    %v68 = vcombine.low %v54, %v58
    %v70 = vunpack.c.l.s4 1983009808
    %v71 = vunpack.c.0.s8 %v70
    %v72 = vlaneseq
    %v73 = vshrl.u32 %v72, 7
    %v74 = vsub.s32 %v71, %v73
    %v75 = vrot.slane %v67, %v74
    %v77 = vunpack.c.l.s4 1983009808
    %v78 = vunpack.c.0.s8 %v77
    %v79 = vlaneseq
    %v80 = vshrl.u32 %v79, 7
    %v81 = vsub.s32 %v78, %v80
    %v82 = vrot.slane %v68, %v81
    %v83 = vcombine.low %v75, %v82
    %v84 = vcombine.low %v62, %v66
    %v86 = vunpack.c.l.s4 1983009808
    %v87 = vunpack.c.0.s8 %v86
    %v88 = vlaneseq
    %v89 = vshrl.u32 %v88, 7
    %v90 = vsub.s32 %v87, %v89
    %v91 = vrot.slane %v84, %v90
    %v94 = vmul.f32 %v39, %v83
    %v95 = vmul.f32 %v40, %v91
    %v96 = vld [vmem:[%s2] sm:$0x3f]
    %v98 = vlaneseq
    %v99 = vshrl.u32 %v98, 7
    %v100 = vsub.s32 0, %v99
    %v101 = vrot.slane %v96, %v100
    %v102 = vlaneseq
    %v103 = vshrl.u32 %v102, 7
    %v104 = vsub.s32 1, %v103
    %v105 = vrot.slane %v96, %v104
    %v106 = vlaneseq
    %v107 = vshrl.u32 %v106, 7
    %v108 = vsub.s32 2, %v107
    %v109 = vrot.slane %v96, %v108
    %v110 = vlaneseq
    %v111 = vshrl.u32 %v110, 7
    %v112 = vsub.s32 3, %v111
    %v113 = vrot.slane %v96, %v112
    %v114 = vlaneseq
    %v115 = vshrl.u32 %v114, 7
    %v116 = vsub.s32 4, %v115
    %v117 = vrot.slane %v96, %v116
    %v118 = vlaneseq
    %v119 = vshrl.u32 %v118, 7
    %v120 = vsub.s32 5, %v119
    %v121 = vrot.slane %v96, %v120
    %v122 = vcombine.low %v101, %v105
    %v123 = vcombine.low %v109, %v113
    %v125 = vunpack.c.l.s4 1983009808
    %v126 = vunpack.c.0.s8 %v125
    %v127 = vlaneseq
    %v128 = vshrl.u32 %v127, 7
    %v129 = vsub.s32 %v126, %v128
    %v130 = vrot.slane %v122, %v129
    %v132 = vunpack.c.l.s4 1983009808
    %v133 = vunpack.c.0.s8 %v132
    %v134 = vlaneseq
    %v135 = vshrl.u32 %v134, 7
    %v136 = vsub.s32 %v133, %v135
    %v137 = vrot.slane %v123, %v136
    %v138 = vcombine.low %v130, %v137
    %v139 = vcombine.low %v117, %v121
    %v141 = vunpack.c.l.s4 1983009808
    %v142 = vunpack.c.0.s8 %v141
    %v143 = vlaneseq
    %v144 = vshrl.u32 %v143, 7
    %v145 = vsub.s32 %v142, %v144
    %v146 = vrot.slane %v139, %v145
    %v149 = vadd.f32 %v94, %v138
    %v150 = vadd.f32 %v95, %v146
    %151 = vst [vmem:[#allocation7] sm:$0xff] %v149
    %152 = vst [vmem:[#allocation7 + $0x8] sm:$0xf] %v150
    // Predicated region
    $region22: #{tpu_custom_call.1} parent=1 // pred_check
      _
    $region23: #{tpu_custom_call.1} parent=1 // pred_check_branch
      %154 = sbr.rel (0) target = $region25
    $region24: #{tpu_custom_call.1} parent=1 // pred_region
      %s156 = ssub.s32 192, 192
      %157 = vsyncadd [#allocation4], %s156
      %s159 = sshll.u32 [#allocation7], 4
      %s160 = int_to_ptr.vmem [resolvable:$true] %s159
      %162 = dma.vmem_to_hbm [thread:$0]  %s160, 192, %s3, [#allocation4]
    $region25: #{tpu_custom_call.1} parent=1 // pred_fallthru
      _
    // Predicated region
    $region26: #{tpu_custom_call.1} parent=1 // pred_check
      _
    $region27: #{tpu_custom_call.1} parent=1 // pred_check_branch
      %164 = sbr.rel (0) target = $region29
    $region28: #{tpu_custom_call.1} parent=1 // pred_region
      %165 = dma.done [#allocation4], 192
    $region29: #{tpu_custom_call.1} parent=1 // pred_fallthru
      _
    %166 = vsyncpa [#allocation3], 1
    %167 = vsyncpa [#allocation6], 1
    %168 = vsyncpa [#allocation4], 1

</llo_original>
